<compile_context>
chip_gen: v6e
topology: v6e:2x2x1
jax: 0.10.0
libtpu: 0.0.40
codegen_flags: <defaults>
</compile_context>

<pallas_src>
import functools

import jax
import jax.numpy as jnp
from jax.experimental import pallas as pl
from jax.experimental.pallas import tpu as pltpu


def _initial_block_kernel(tr, wo, ph_ref, w_ref, scale_ref, bias_ref,
                          alpha_ref, out_ref):
    """One (batch, row-tile) grid step.

    ph_ref   : (3, 2, C_in, (tr+1)*wo)  column-tap kx / row-parity planes with
               ph[kx, a, c, i*wo + j] == xpad[c, 2*i + a, 2*j + kx]
    w_ref    : (C_conv, 9*C_in)         conv weight, (ky, kx, ci) minor order
    scale_ref: (C_conv, 1)              folded BN scale
    bias_ref : (C_conv, 1)              folded conv-bias + BN bias
    alpha_ref: (C_conv, 1)              PReLU slope
    out_ref  : (C_out, tr*wo)           [conv ; maxpool] channel-major block
    """
    tp = tr * wo

    # Load each of the 6 (kx, row-parity) planes once; every conv tap and the
    # whole 2x2 maxpool window are static slices of these planes.
    planes = [[ph_ref[kx, a] for a in range(2)] for kx in range(3)]

    def tap(ky, kx):
        a, rs = ky % 2, ky // 2
        return planes[kx][a][:, rs * wo:rs * wo + tp]       # (C_in, tp)

    # Conv branch: stack the 9 taps along the sublane (K) axis, one MXU matmul
    # with the spatial tile on the lane axis.
    taps = jnp.concatenate(
        [tap(ky, kx) for ky in range(3) for kx in range(3)], axis=0)
    conv = jnp.dot(w_ref[...], taps, preferred_element_type=jnp.float32)
    y = conv * scale_ref[...] + bias_ref[...]               # folded BatchNorm
    y = jnp.where(y > 0, y, alpha_ref[...] * y)             # PReLU

    # Maxpool branch: the 2x2 / stride-2 window is exactly taps (1,1)..(2,2)
    # of the padded conv input (zero padding never enters these taps).
    pooled = jnp.maximum(jnp.maximum(tap(1, 1), tap(1, 2)),
                         jnp.maximum(tap(2, 1), tap(2, 2)))

    out_ref[...] = jnp.concatenate(
        [y.astype(out_ref.dtype), pooled.astype(out_ref.dtype)], axis=0)


def _pick_row_tile(ho, wo, target_lanes=8192):
    """Largest TR | Ho with TR*Wo <= target and lane-aligned tiles (or Ho)."""
    for tr in range(ho, 0, -1):
        if ho % tr:
            continue
        if tr * wo > target_lanes:
            continue
        if tr != ho and (tr * wo) % 128:
            continue
        return tr
    return ho


def initial_block_forward(x_nchw, w, b_conv, gamma, beta, r_mean, r_var,
                          alpha, eps=1e-5):
    N, C_in, H, W = x_nchw.shape
    C_conv = w.shape[0]
    C_out = C_conv + C_in
    assert H % 2 == 0 and W % 2 == 0, "ENet InitialBlock expects even H, W"
    Ho, Wo = H // 2, W // 2
    P = Ho * Wo
    K = 9 * C_in

    TR = _pick_row_tile(Ho, Wo)
    nT = Ho // TR
    TP = TR * Wo

    # ---- glue: one XLA formatting pass (~1.5x input bytes, no 9x im2col) ----
    # ph[n, kx, a, c, i, j] = xpad[n, c, 2*i + a, 2*j + kx]
    xpad = jnp.pad(x_nchw, ((0, 0), (0, 0), (1, 1), (1, 1)))
    cols = jnp.stack([xpad[..., kx:kx + W:2] for kx in range(3)], axis=1)
    ph = cols.reshape(N, 3, C_in, Ho + 1, 2, Wo)
    ph = jnp.transpose(ph, (0, 1, 4, 2, 3, 5))              # (N,3,2,C,Ho+1,Wo)

    # Row tiles with a one-row halo, flattened to a lane-dense (TR+1)*Wo axis.
    ridx = (jnp.arange(nT) * TR)[:, None] + jnp.arange(TR + 1)[None, :]
    pht = ph[:, :, :, :, ridx, :]                           # (N,3,2,C,nT,TR+1,Wo)
    pht = jnp.transpose(pht, (0, 4, 1, 2, 3, 5, 6))         # (N,nT,3,2,C,TR+1,Wo)
    pht = pht.reshape(N, nT, 3, 2, C_in, (TR + 1) * Wo)

    # Fold conv bias + inference BatchNorm into per-channel scale/bias columns.
    scale = (gamma / jnp.sqrt(r_var + eps)).astype(jnp.float32)
    bias = ((b_conv - r_mean) * scale + beta).astype(jnp.float32)
    alpha_col = jnp.broadcast_to(
        jnp.reshape(jnp.asarray(alpha, jnp.float32), (-1, 1)), (C_conv, 1))
    # PyTorch conv weight (C_conv, C_in, kh, kw) -> (C_conv, kh*kw*C_in),
    # matching the (ky, kx, ci) ordering of the in-kernel tap concat.
    w_mat = jnp.transpose(w, (0, 2, 3, 1)).reshape(C_conv, K)

    kernel = functools.partial(_initial_block_kernel, TR, Wo)
    out = pl.pallas_call(
        kernel,
        out_shape=jax.ShapeDtypeStruct((N, C_out, P), x_nchw.dtype),
        grid=(N, nT),
        in_specs=[
            pl.BlockSpec((None, None, 3, 2, C_in, (TR + 1) * Wo),
                         lambda n, t: (n, t, 0, 0, 0, 0)),
            pl.BlockSpec((C_conv, K), lambda n, t: (0, 0)),
            pl.BlockSpec((C_conv, 1), lambda n, t: (0, 0)),
            pl.BlockSpec((C_conv, 1), lambda n, t: (0, 0)),
            pl.BlockSpec((C_conv, 1), lambda n, t: (0, 0)),
        ],
        out_specs=pl.BlockSpec((None, C_out, TP), lambda n, t: (n, 0, t)),
        compiler_params=pltpu.CompilerParams(
            dimension_semantics=("parallel", "parallel")),
    )(pht, w_mat, scale.reshape(C_conv, 1), bias.reshape(C_conv, 1), alpha_col)

    # (N, C_out, Ho*Wo) is already channel-major: free reshape to NCHW.
    return out.reshape(N, C_out, Ho, Wo)


def _reference(x, w, b_conv, gamma, beta, r_mean, r_var, alpha, eps=1e-5):
    conv = jax.lax.conv_general_dilated(
        x, w, window_strides=(2, 2), padding=((1, 1), (1, 1)),
        dimension_numbers=("NCHW", "OIHW", "NCHW"))
    conv = conv + b_conv[None, :, None, None]
    scale = (gamma / jnp.sqrt(r_var + eps))[None, :, None, None]
    y = (conv - r_mean[None, :, None, None]) * scale + beta[None, :, None, None]
    y = jnp.where(y > 0, y, alpha * y)
    mp = jax.lax.reduce_window(x, -jnp.inf, jax.lax.max,
                               (1, 1, 2, 2), (1, 1, 2, 2), "VALID")
    return jnp.concatenate([y, mp], axis=1)


if __name__ == "__main__":
    in_ch, out_ch = 4, 16
    c_conv = out_ch - in_ch
    N, H, W = 2, 16, 16

    key = jax.random.PRNGKey(0)
    k_x, k_w, k_b, k_g, k_be, k_m, k_v = jax.random.split(key, 7)

    x = jax.random.normal(k_x, (N, in_ch, H, W), jnp.float32)
    w = 0.1 * jax.random.normal(k_w, (c_conv, in_ch, 3, 3), jnp.float32)
    b_conv = 0.1 * jax.random.normal(k_b, (c_conv,), jnp.float32)
    gamma = 1.0 + 0.1 * jax.random.normal(k_g, (c_conv,), jnp.float32)
    beta = 0.1 * jax.random.normal(k_be, (c_conv,), jnp.float32)
    r_mean = 0.1 * jax.random.normal(k_m, (c_conv,), jnp.float32)
    r_var = 1.0 + 0.5 * jax.random.uniform(k_v, (c_conv,), jnp.float32)
    alpha = jnp.float32(0.25)  # nn.PReLU default (single shared parameter)

    out = initial_block_forward(x, w, b_conv, gamma, beta, r_mean, r_var, alpha)
    out = jax.block_until_ready(out)

    ref = _reference(x, w, b_conv, gamma, beta, r_mean, r_var, alpha)
    assert out.shape == (N, out_ch, H // 2, W // 2), out.shape
    assert jnp.allclose(out, ref, atol=1e-4, rtol=1e-4)

    print("KERNEL_OK")
</pallas_src>

<mosaic_0001>
module attributes {stable_mosaic.version = 11 : i64} {
  func.func @_initial_block_kernel(%arg0: i32, %arg1: i32, %arg2: memref<1x1x3x2x4x72xf32, #tpu.memory_space<vmem>>, %arg3: memref<12x36xf32, #tpu.memory_space<vmem>>, %arg4: memref<12x1xf32, #tpu.memory_space<vmem>>, %arg5: memref<12x1xf32, #tpu.memory_space<vmem>>, %arg6: memref<12x1xf32, #tpu.memory_space<vmem>>, %arg7: memref<1x16x64xf32, #tpu.memory_space<vmem>>) attributes {dimension_semantics = [#tpu.dimension_semantics<parallel>, #tpu.dimension_semantics<parallel>], iteration_bounds = array<i64: 2, 1>, scalar_prefetch = 0 : i64, scratch_operands = 0 : i64, tpu.core_type = #tpu.core_type<tc>, window_params = [{transform_indices = @transform_0, window_bounds = array<i64: 1, 1, 3, 2, 4, 72>}, {pipeline_mode = #tpu.pipeline_mode<synchronous>, transform_indices = @transform_1, window_bounds = array<i64: 12, 36>}, {pipeline_mode = #tpu.pipeline_mode<synchronous>, transform_indices = @transform_2, window_bounds = array<i64: 12, 1>}, {pipeline_mode = #tpu.pipeline_mode<synchronous>, transform_indices = @transform_3, window_bounds = array<i64: 12, 1>}, {pipeline_mode = #tpu.pipeline_mode<synchronous>, transform_indices = @transform_4, window_bounds = array<i64: 12, 1>}, {transform_indices = @transform_5, window_bounds = array<i64: 1, 16, 64>}]} {
    %c0 = arith.constant 0 : index
    %c0_0 = arith.constant 0 : index
    %c0_1 = arith.constant 0 : index
    %c0_2 = arith.constant 0 : index
    %c0_3 = arith.constant 0 : index
    %c0_4 = arith.constant 0 : index
    %0 = vector.load %arg2[%c0, %c0_0, %c0_1, %c0_2, %c0_3, %c0_4] : memref<1x1x3x2x4x72xf32, #tpu.memory_space<vmem>>, vector<1x1x1x1x4x72xf32>
    %1 = vector.shape_cast %0 : vector<1x1x1x1x4x72xf32> to vector<4x72xf32>
    %c0_5 = arith.constant 0 : index
    %c0_6 = arith.constant 0 : index
    %c0_7 = arith.constant 0 : index
    %c1 = arith.constant 1 : index
    %c0_8 = arith.constant 0 : index
    %c0_9 = arith.constant 0 : index
    %2 = vector.load %arg2[%c0_5, %c0_6, %c0_7, %c1, %c0_8, %c0_9] : memref<1x1x3x2x4x72xf32, #tpu.memory_space<vmem>>, vector<1x1x1x1x4x72xf32>
    %3 = vector.shape_cast %2 : vector<1x1x1x1x4x72xf32> to vector<4x72xf32>
    %c0_10 = arith.constant 0 : index
    %c0_11 = arith.constant 0 : index
    %c1_12 = arith.constant 1 : index
    %c0_13 = arith.constant 0 : index
    %c0_14 = arith.constant 0 : index
    %c0_15 = arith.constant 0 : index
    %4 = vector.load %arg2[%c0_10, %c0_11, %c1_12, %c0_13, %c0_14, %c0_15] : memref<1x1x3x2x4x72xf32, #tpu.memory_space<vmem>>, vector<1x1x1x1x4x72xf32>
    %5 = vector.shape_cast %4 : vector<1x1x1x1x4x72xf32> to vector<4x72xf32>
    %c0_16 = arith.constant 0 : index
    %c0_17 = arith.constant 0 : index
    %c1_18 = arith.constant 1 : index
    %c1_19 = arith.constant 1 : index
    %c0_20 = arith.constant 0 : index
    %c0_21 = arith.constant 0 : index
    %6 = vector.load %arg2[%c0_16, %c0_17, %c1_18, %c1_19, %c0_20, %c0_21] : memref<1x1x3x2x4x72xf32, #tpu.memory_space<vmem>>, vector<1x1x1x1x4x72xf32>
    %7 = vector.shape_cast %6 : vector<1x1x1x1x4x72xf32> to vector<4x72xf32>
    %c0_22 = arith.constant 0 : index
    %c0_23 = arith.constant 0 : index
    %c2 = arith.constant 2 : index
    %c0_24 = arith.constant 0 : index
    %c0_25 = arith.constant 0 : index
    %c0_26 = arith.constant 0 : index
    %8 = vector.load %arg2[%c0_22, %c0_23, %c2, %c0_24, %c0_25, %c0_26] : memref<1x1x3x2x4x72xf32, #tpu.memory_space<vmem>>, vector<1x1x1x1x4x72xf32>
    %9 = vector.shape_cast %8 : vector<1x1x1x1x4x72xf32> to vector<4x72xf32>
    %c0_27 = arith.constant 0 : index
    %c0_28 = arith.constant 0 : index
    %c2_29 = arith.constant 2 : index
    %c1_30 = arith.constant 1 : index
    %c0_31 = arith.constant 0 : index
    %c0_32 = arith.constant 0 : index
    %10 = vector.load %arg2[%c0_27, %c0_28, %c2_29, %c1_30, %c0_31, %c0_32] : memref<1x1x3x2x4x72xf32, #tpu.memory_space<vmem>>, vector<1x1x1x1x4x72xf32>
    %11 = vector.shape_cast %10 : vector<1x1x1x1x4x72xf32> to vector<4x72xf32>
    %12 = vector.extract_strided_slice %1 {offsets = [0, 0], sizes = [4, 64], strides = [1, 1]} : vector<4x72xf32> to vector<4x64xf32>
    %13 = vector.extract_strided_slice %5 {offsets = [0, 0], sizes = [4, 64], strides = [1, 1]} : vector<4x72xf32> to vector<4x64xf32>
    %14 = vector.extract_strided_slice %9 {offsets = [0, 0], sizes = [4, 64], strides = [1, 1]} : vector<4x72xf32> to vector<4x64xf32>
    %15 = vector.extract_strided_slice %3 {offsets = [0, 0], sizes = [4, 64], strides = [1, 1]} : vector<4x72xf32> to vector<4x64xf32>
    %16 = vector.extract_strided_slice %7 {offsets = [0, 0], sizes = [4, 64], strides = [1, 1]} : vector<4x72xf32> to vector<4x64xf32>
    %17 = vector.extract_strided_slice %11 {offsets = [0, 0], sizes = [4, 64], strides = [1, 1]} : vector<4x72xf32> to vector<4x64xf32>
    %18 = vector.extract_strided_slice %1 {offsets = [0, 8], sizes = [4, 64], strides = [1, 1]} : vector<4x72xf32> to vector<4x64xf32>
    %19 = vector.extract_strided_slice %5 {offsets = [0, 8], sizes = [4, 64], strides = [1, 1]} : vector<4x72xf32> to vector<4x64xf32>
    %20 = vector.extract_strided_slice %9 {offsets = [0, 8], sizes = [4, 64], strides = [1, 1]} : vector<4x72xf32> to vector<4x64xf32>
    %21 = tpu.concatenate %12, %13, %14, %15, %16, %17, %18, %19, %20 in 0 : vector<4x64xf32>, vector<4x64xf32>, vector<4x64xf32>, vector<4x64xf32>, vector<4x64xf32>, vector<4x64xf32>, vector<4x64xf32>, vector<4x64xf32>, vector<4x64xf32> -> vector<36x64xf32>
    %c0_33 = arith.constant 0 : index
    %c0_34 = arith.constant 0 : index
    %22 = vector.load %arg3[%c0_33, %c0_34] : memref<12x36xf32, #tpu.memory_space<vmem>>, vector<12x36xf32>
    %cst = arith.constant dense<0.000000e+00> : vector<12x64xf32>
    %23 = tpu.matmul %22, %21, %cst {dimension_numbers = #tpu.dot_dimension_numbers<[1], [0], [0], [1], [0, 0, 1, 1], [], []>} : vector<12x36xf32>, vector<36x64xf32>, vector<12x64xf32> -> vector<12x64xf32>
    %c0_35 = arith.constant 0 : index
    %c0_36 = arith.constant 0 : index
    %24 = vector.load %arg4[%c0_35, %c0_36] : memref<12x1xf32, #tpu.memory_space<vmem>>, vector<12x1xf32>
    %25 = vector.broadcast %24 : vector<12x1xf32> to vector<12x64xf32>
    %26 = arith.mulf %23, %25 : vector<12x64xf32>
    %c0_37 = arith.constant 0 : index
    %c0_38 = arith.constant 0 : index
    %27 = vector.load %arg5[%c0_37, %c0_38] : memref<12x1xf32, #tpu.memory_space<vmem>>, vector<12x1xf32>
    %28 = vector.broadcast %27 : vector<12x1xf32> to vector<12x64xf32>
    %29 = arith.addf %26, %28 : vector<12x64xf32>
    %cst_39 = arith.constant 0.000000e+00 : f32
    %30 = vector.broadcast %cst_39 : f32 to vector<12x64xf32>
    %31 = arith.cmpf ogt, %29, %30 : vector<12x64xf32>
    %c0_40 = arith.constant 0 : index
    %c0_41 = arith.constant 0 : index
    %32 = vector.load %arg6[%c0_40, %c0_41] : memref<12x1xf32, #tpu.memory_space<vmem>>, vector<12x1xf32>
    %33 = vector.broadcast %32 : vector<12x1xf32> to vector<12x64xf32>
    %34 = arith.mulf %33, %29 : vector<12x64xf32>
    %35 = arith.select %31, %29, %34 : vector<12x64xi1>, vector<12x64xf32>
    %36 = vector.extract_strided_slice %7 {offsets = [0, 0], sizes = [4, 64], strides = [1, 1]} : vector<4x72xf32> to vector<4x64xf32>
    %37 = vector.extract_strided_slice %11 {offsets = [0, 0], sizes = [4, 64], strides = [1, 1]} : vector<4x72xf32> to vector<4x64xf32>
    %38 = arith.maximumf %36, %37 : vector<4x64xf32>
    %39 = vector.extract_strided_slice %5 {offsets = [0, 8], sizes = [4, 64], strides = [1, 1]} : vector<4x72xf32> to vector<4x64xf32>
    %40 = vector.extract_strided_slice %9 {offsets = [0, 8], sizes = [4, 64], strides = [1, 1]} : vector<4x72xf32> to vector<4x64xf32>
    %41 = arith.maximumf %39, %40 : vector<4x64xf32>
    %42 = arith.maximumf %38, %41 : vector<4x64xf32>
    %43 = tpu.concatenate %35, %42 in 0 : vector<12x64xf32>, vector<4x64xf32> -> vector<16x64xf32>
    %c0_42 = arith.constant 0 : index
    %c0_43 = arith.constant 0 : index
    %c0_44 = arith.constant 0 : index
    %44 = vector.load %arg7[%c0_42, %c0_43, %c0_44] : memref<1x16x64xf32, #tpu.memory_space<vmem>>, vector<1x16x64xf32>
    %45 = vector.shape_cast %44 : vector<1x16x64xf32> to vector<16x64xf32>
    %46 = vector.shape_cast %43 : vector<16x64xf32> to vector<1x16x64xf32>
    tpu.vector_store %arg7[%c0_42, %c0_43, %c0_44], %46 {strides = array<i32>} : memref<1x16x64xf32, #tpu.memory_space<vmem>>, vector<1x16x64xf32>,
    return
  }
  func.func @transform_0(%arg0: i32, %arg1: i32) -> (i32, i32, i32, i32, i32, i32) {
    %c0_i32 = arith.constant 0 : i32
    %c0_i32_0 = arith.constant 0 : i32
    %c0_i32_1 = arith.constant 0 : i32
    %c0_i32_2 = arith.constant 0 : i32
    %c0_i32_3 = arith.constant 0 : i32
    return %arg0, %arg1, %c0_i32, %c0_i32_0, %c0_i32_1, %c0_i32_2 : i32, i32, i32, i32, i32, i32
  }
  func.func @transform_1(%arg0: i32, %arg1: i32) -> (i32, i32) {
    %c0_i32 = arith.constant 0 : i32
    %c0_i32_0 = arith.constant 0 : i32
    %c0_i32_1 = arith.constant 0 : i32
    return %c0_i32, %c0_i32_0 : i32, i32
  }
  func.func @transform_2(%arg0: i32, %arg1: i32) -> (i32, i32) {
    %c0_i32 = arith.constant 0 : i32
    %c0_i32_0 = arith.constant 0 : i32
    %c0_i32_1 = arith.constant 0 : i32
    return %c0_i32, %c0_i32_0 : i32, i32
  }
  func.func @transform_3(%arg0: i32, %arg1: i32) -> (i32, i32) {
    %c0_i32 = arith.constant 0 : i32
    %c0_i32_0 = arith.constant 0 : i32
    %c0_i32_1 = arith.constant 0 : i32
    return %c0_i32, %c0_i32_0 : i32, i32
  }
  func.func @transform_4(%arg0: i32, %arg1: i32) -> (i32, i32) {
    %c0_i32 = arith.constant 0 : i32
    %c0_i32_0 = arith.constant 0 : i32
    %c0_i32_1 = arith.constant 0 : i32
    return %c0_i32, %c0_i32_0 : i32, i32
  }
  func.func @transform_5(%arg0: i32, %arg1: i32) -> (i32, i32, i32) {
    %c0_i32 = arith.constant 0 : i32
    %c0_i32_0 = arith.constant 0 : i32
    return %arg0, %c0_i32, %arg1 : i32, i32, i32
  }
}

</mosaic_0001>

<llo_original>
// kernel: tpu_custom_call.1
$region0: #{tpu_custom_call.1}
  #allocation0 [shape = 'u32[]', space=smem, size = 0x4, offset = 0x4, fixed_abs, tag = 'smem constant byte address 0x4 - core index']
  #allocation1 [shape = 'u32[144,128]{1,0:T(1,128)}', space=vmem, size = 0x12000, scoped, tag = 'internal scratch']
  %s0 = inlined_call_operand.vmem [shape: f32[2,1,3,2,4,72], index: 0, kind: input, shape index: {}]
  %s1 = inlined_call_operand.hbm [shape: f32[12,36], index: 1, kind: input, shape index: {}]
  %s2 = inlined_call_operand.vmem [shape: f32[12,1], index: 2, kind: input, shape index: {}]
  %s3 = inlined_call_operand.vmem [shape: f32[12,1], index: 3, kind: input, shape index: {}]
  %s4 = inlined_call_operand.vmem [shape: f32[12,1], index: 4, kind: input, shape index: {}]
  %s5 = inlined_call_operand.hbm [shape: f32[2,16,64], index: 5, kind: output, shape index: {}]
  %s6 = sld [smem:[#allocation0]]
  $region57: #{tpu_custom_call.1} parent=0
    _
  %s8 = ssub.s32 1, %s6
  %s9 = scalar_select 0, %s8, %s6
  $region1: #{tpu_custom_call.1} parent=0
    #allocation2 [shape = 'u8[8192]{0}', space=vmem, size = 0x2000, scoped, tag = 'input window, operand 1, single buffered']
    #allocation3 [shape = 's32[2]{0}', space=sflag, size = 0x8, scoped, tag = 'scoped memory for tpu_custom_call.1']
    #allocation4 [shape = 's32[2]{0}', space=sflag, size = 0x8, scoped, tag = 'scoped memory for tpu_custom_call.1']
    #allocation5 [shape = 'u8[16384]{0}', space=vmem, size = 0x4000, scoped, tag = 'output window, operand 0']
    %10 = vsyncpa [#allocation3], 0
    %11 = vsyncpa [#allocation4], 0
    %s12 = scalar_lea.sflag [#allocation4], 1
    %13 = vsyncpa %s12, 0
    loop: start=0, step=1, limit=4
    $region2: #{tpu_custom_call.1} parent=1 // loop_pre_header
      _
    $region3: #{tpu_custom_call.1} parent=1 // loop_header
      %s15 = sphi 0, %s19
      %p16 = scmp.ge.s32.totalorder %s15, 4
      %s22 = sphi 0, %s34
      %s23 = sphi 0, %s30
      %s24 = sphi 0, %s22
      %s25 = sphi 0, %s23
      %s26 = sphi 0, %s24
      %s27 = sphi 0, %s25
      %s39 = sphi 0, %s41
      %s42 = sphi 0, %s39
      %s43 = sphi 0, %s42
      %s59 = sphi 0, %s43
      %s63 = sphi 0, %s63
      %s65 = sphi 0, %s63
      %s66 = sphi 0, %s65
      %s80 = sphi 0, %s66
      %s84 = sphi 0, %s84
      %s86 = sphi 0, %s84
      %s87 = sphi 0, %s86
      %s101 = sphi 0, %s87
      %s105 = sphi 0, %s105
      %s107 = sphi 0, %s105
      %s108 = sphi 0, %s107
      %s122 = sphi 0, %s108
      %s126 = sphi 0, %s126
      %s128 = sphi 0, %s126
      %s129 = sphi 0, %s128
      %s143 = sphi 0, %s129
      %s151 = sphi 0, %s153
      %s154 = sphi 0, %s151
      %s155 = sphi 0, %s154
      %s171 = sphi 0, %s155
    $region4: #{tpu_custom_call.1} parent=1 // loop_header_branch
      %18 = sbr.rel (%p16) target = $region8
    $region5: #{tpu_custom_call.1} parent=1 // loop_body
      %s20 = ssub.s32 %s15, 1
      %s21 = ssub.s32 %s15, 2
      %s28 = sadd.s32 1, %s23
      %p29 = scmp.ge.s32.totalorder %s28, 1
      %s30 = scalar_select %p29, 0, %s28
      %s31 = sadd.s32 1, %s22
      %s32 = scalar_select %p29, %s31, %s22
      %p33 = scmp.ge.s32.totalorder %s32, 2
      %s34 = scalar_select %p33, 0, %s32
      %s35 = ssub.s32 %s22, %s34
      %s36 = ssub.s32 %s23, %s30
      %s37 = sor.u32 %s35, %s36
      %p38 = scmp.eq.s32.totalorder %s37, 0
      %s40 = sadd.s32 %s39, 1
      %s41 = scalar_select %p38, %s39, %s40
      %p44 = pneg %p38
      %p45 = scmp.eq.s32.totalorder %s15, 1
      %p46 = por %p44, %p45
      %p47 = scmp.ne.s32.totalorder %s39, %s42
      %p48 = scmp.eq.s32.totalorder %s15, 0
      %p49 = por %p47, %p48
      %p50 = scmp.ne.s32.totalorder %s39, %s42
      %p51 = scmp.eq.s32.totalorder %s20, 1
      %p52 = por %p50, %p51
      %p53 = scmp.ne.s32.totalorder %s42, %s43
      %p54 = scmp.eq.s32.totalorder %s20, 0
      %p55 = por %p53, %p54
      %p56 = scmp.ne.s32.totalorder %s42, %s43
      %p57 = scmp.eq.s32.totalorder %s21, 1
      %p58 = por %p56, %p57
      %p60 = scmp.ne.s32.totalorder %s43, %s59
      %p61 = scmp.eq.s32.totalorder %s21, 0
      %p62 = por %p60, %p61
      %s64 = sadd.s32 %s63, 1
      %p67 = scmp.eq.s32.totalorder %s15, 1
      %p68 = scmp.ne.s32.totalorder %s63, %s65
      %p69 = scmp.eq.s32.totalorder %s15, 0
      %p70 = por %p68, %p69
      %p71 = scmp.ne.s32.totalorder %s63, %s65
      %p72 = scmp.eq.s32.totalorder %s20, 1
      %p73 = por %p71, %p72
      %p74 = scmp.ne.s32.totalorder %s65, %s66
      %p75 = scmp.eq.s32.totalorder %s20, 0
      %p76 = por %p74, %p75
      %p77 = scmp.ne.s32.totalorder %s65, %s66
      %p78 = scmp.eq.s32.totalorder %s21, 1
      %p79 = por %p77, %p78
      %p81 = scmp.ne.s32.totalorder %s66, %s80
      %p82 = scmp.eq.s32.totalorder %s21, 0
      %p83 = por %p81, %p82
      %s85 = sadd.s32 %s84, 1
      %p88 = scmp.eq.s32.totalorder %s15, 1
      %p89 = scmp.ne.s32.totalorder %s84, %s86
      %p90 = scmp.eq.s32.totalorder %s15, 0
      %p91 = por %p89, %p90
      %p92 = scmp.ne.s32.totalorder %s84, %s86
      %p93 = scmp.eq.s32.totalorder %s20, 1
      %p94 = por %p92, %p93
      %p95 = scmp.ne.s32.totalorder %s86, %s87
      %p96 = scmp.eq.s32.totalorder %s20, 0
      %p97 = por %p95, %p96
      %p98 = scmp.ne.s32.totalorder %s86, %s87
      %p99 = scmp.eq.s32.totalorder %s21, 1
      %p100 = por %p98, %p99
      %p102 = scmp.ne.s32.totalorder %s87, %s101
      %p103 = scmp.eq.s32.totalorder %s21, 0
      %p104 = por %p102, %p103
      %s106 = sadd.s32 %s105, 1
      %p109 = scmp.eq.s32.totalorder %s15, 1
      %p110 = scmp.ne.s32.totalorder %s105, %s107
      %p111 = scmp.eq.s32.totalorder %s15, 0
      %p112 = por %p110, %p111
      %p113 = scmp.ne.s32.totalorder %s105, %s107
      %p114 = scmp.eq.s32.totalorder %s20, 1
      %p115 = por %p113, %p114
      %p116 = scmp.ne.s32.totalorder %s107, %s108
      %p117 = scmp.eq.s32.totalorder %s20, 0
      %p118 = por %p116, %p117
      %p119 = scmp.ne.s32.totalorder %s107, %s108
      %p120 = scmp.eq.s32.totalorder %s21, 1
      %p121 = por %p119, %p120
      %p123 = scmp.ne.s32.totalorder %s108, %s122
      %p124 = scmp.eq.s32.totalorder %s21, 0
      %p125 = por %p123, %p124
      %s127 = sadd.s32 %s126, 1
      %p130 = scmp.eq.s32.totalorder %s15, 1
      %p131 = scmp.ne.s32.totalorder %s126, %s128
      %p132 = scmp.eq.s32.totalorder %s15, 0
      %p133 = por %p131, %p132
      %p134 = scmp.ne.s32.totalorder %s126, %s128
      %p135 = scmp.eq.s32.totalorder %s20, 1
      %p136 = por %p134, %p135
      %p137 = scmp.ne.s32.totalorder %s128, %s129
      %p138 = scmp.eq.s32.totalorder %s20, 0
      %p139 = por %p137, %p138
      %p140 = scmp.ne.s32.totalorder %s128, %s129
      %p141 = scmp.eq.s32.totalorder %s21, 1
      %p142 = por %p140, %p141
      %p144 = scmp.ne.s32.totalorder %s129, %s143
      %p145 = scmp.eq.s32.totalorder %s21, 0
      %p146 = por %p144, %p145
      %s147 = ssub.s32 %s22, %s34
      %s148 = ssub.s32 %s23, %s30
      %s149 = sor.u32 %s147, %s148
      %p150 = scmp.eq.s32.totalorder %s149, 0
      %s152 = sadd.s32 %s151, 1
      %s153 = scalar_select %p150, %s151, %s152
      %p156 = pneg %p150
      %p157 = scmp.eq.s32.totalorder %s15, 1
      %p158 = por %p156, %p157
      %p159 = scmp.ne.s32.totalorder %s151, %s154
      %p160 = scmp.eq.s32.totalorder %s15, 0
      %p161 = por %p159, %p160
      %p162 = scmp.ne.s32.totalorder %s151, %s154
      %p163 = scmp.eq.s32.totalorder %s20, 1
      %p164 = por %p162, %p163
      %p165 = scmp.ne.s32.totalorder %s154, %s155
      %p166 = scmp.eq.s32.totalorder %s20, 0
      %p167 = por %p165, %p166
      %p168 = scmp.ne.s32.totalorder %s154, %s155
      %p169 = scmp.eq.s32.totalorder %s21, 1
      %p170 = por %p168, %p169
      %p172 = scmp.ne.s32.totalorder %s155, %s171
      %p173 = scmp.eq.s32.totalorder %s21, 0
      %p174 = por %p172, %p173
      %p175 = scmp.le.s32.totalorder 1, %s15
      %p176 = scmp.lt.s32.totalorder %s15, 3
      %p177 = pnand %p175, %p176
      %p178 = pneg %p177
      // Predicated region
      $region9: #{tpu_custom_call.1} parent=5 // pred_check
        _
      $region10: #{tpu_custom_call.1} parent=5 // pred_check_branch
        %180 = sbr.rel (%p177) target = $region12
      $region11: #{tpu_custom_call.1} parent=5 // pred_region
        %s181 = ssub.s32 %s15, 1
        // Predicated region
        $region13: #{tpu_custom_call.1} parent=11 // pred_check
          %p182 = pneg %p76
        $region14: #{tpu_custom_call.1} parent=11 // pred_check_branch
          %184 = sbr.rel (%p182) target = $region16
        $region15: #{tpu_custom_call.1} parent=11 // pred_region
          %s186 = ssub.s32 256, 256
          %187 = vsyncadd [#allocation3], %s186
          %s188 = sshll.u32 [#allocation2], 4
          %s189 = int_to_ptr.vmem [resolvable:$true] %s188
          %194 = dma.hbm_to_vmem [thread:$0]  %s1, 256, %s189, [#allocation3], 128, 128, 8
        $region16: #{tpu_custom_call.1} parent=11 // pred_fallthru
          _
        // Predicated region
        $region17: #{tpu_custom_call.1} parent=11 // pred_check
          %p195 = pneg %p97
        $region18: #{tpu_custom_call.1} parent=11 // pred_check_branch
          %197 = sbr.rel (%p195) target = $region20
        $region19: #{tpu_custom_call.1} parent=11 // pred_region
          _
        $region20: #{tpu_custom_call.1} parent=11 // pred_fallthru
          _
        // Predicated region
        $region21: #{tpu_custom_call.1} parent=11 // pred_check
          %p198 = pneg %p118
        $region22: #{tpu_custom_call.1} parent=11 // pred_check_branch
          %200 = sbr.rel (%p198) target = $region24
        $region23: #{tpu_custom_call.1} parent=11 // pred_region
          _
        $region24: #{tpu_custom_call.1} parent=11 // pred_fallthru
          _
        // Predicated region
        $region25: #{tpu_custom_call.1} parent=11 // pred_check
          %p201 = pneg %p139
        $region26: #{tpu_custom_call.1} parent=11 // pred_check_branch
          %203 = sbr.rel (%p201) target = $region28
        $region27: #{tpu_custom_call.1} parent=11 // pred_region
          _
        $region28: #{tpu_custom_call.1} parent=11 // pred_fallthru
          _
      $region12: #{tpu_custom_call.1} parent=5 // pred_fallthru
        _
      %p204 = scmp.lt.s32.totalorder %s15, 2
      // Predicated region
      $region29: #{tpu_custom_call.1} parent=5 // pred_check
        %p205 = pneg %p204
      $region30: #{tpu_custom_call.1} parent=5 // pred_check_branch
        %207 = sbr.rel (%p205) target = $region32
      $region31: #{tpu_custom_call.1} parent=5 // pred_region
        // Predicated region
        $region33: #{tpu_custom_call.1} parent=31 // pred_check
          %p208 = pneg %p49
        $region34: #{tpu_custom_call.1} parent=31 // pred_check_branch
          %210 = sbr.rel (%p208) target = $region36
        $region35: #{tpu_custom_call.1} parent=31 // pred_region
          %p211 = scmp.lt.s32.totalorder %s22, 1
          %s212 = scalar_select %p211, %s22, 1
          %p213 = scmp.lt.s32.totalorder %s23, 0
          %s214 = scalar_select %p213, %s23, 0
          %s215 = smul.addr %s214, 6
          %s216 = smul.addr %s212, 6
          %s217 = sadd.s32 %s215, %s216
          %s218 = smul.addr %s217, 4
          %s219 = scalar_lea.vmem %s0, %s218
        $region36: #{tpu_custom_call.1} parent=31 // pred_fallthru
          _
      $region32: #{tpu_custom_call.1} parent=5 // pred_fallthru
        _
      %p220 = scmp.le.s32.totalorder 1, %s15
      %p221 = scmp.lt.s32.totalorder %s15, 3
      %p222 = pnand %p220, %p221
      %p223 = pneg %p222
      // Predicated region
      $region37: #{tpu_custom_call.1} parent=5 // pred_check
        _
      $region38: #{tpu_custom_call.1} parent=5 // pred_check_branch
        %225 = sbr.rel (%p222) target = $region40
      $region39: #{tpu_custom_call.1} parent=5 // pred_region
        %s226 = ssub.s32 %s15, 1
        // Predicated region
        $region41: #{tpu_custom_call.1} parent=39 // pred_check
          %p227 = pneg %p76
        $region42: #{tpu_custom_call.1} parent=39 // pred_check_branch
          %229 = sbr.rel (%p227) target = $region44
        $region43: #{tpu_custom_call.1} parent=39 // pred_region
          %230 = dma.done [#allocation3], 256
        $region44: #{tpu_custom_call.1} parent=39 // pred_fallthru
          _
        %p231 = scmp.lt.s32.totalorder %s24, 1
        %s232 = scalar_select %p231, %s24, 1
        %p233 = scmp.lt.s32.totalorder %s25, 0
        %s234 = scalar_select %p233, %s25, 0
        %s235 = smul.addr %s234, 6
        %s236 = smul.addr %s232, 6
        %s237 = sadd.s32 %s235, %s236
        %s238 = smul.addr %s237, 4
        %s239 = scalar_lea.vmem %s0, %s238
        %p240 = pneg %p55
        %p241 = pneg %p52
        %p242 = pneg %p76
        %p243 = pneg %p73
        %p244 = pneg %p97
        %p245 = pneg %p94
        %p246 = pneg %p118
        %p247 = pneg %p115
        %p248 = pneg %p139
        %p249 = pneg %p136
        %p250 = pneg %p167
        %p251 = pneg %p164
        %s252 = sand.u32 %s154, 1
        %s253 = scalar_lea.sflag [#allocation4], %s252
        %s254 = sand.u32 %s154, 1
        %s255 = smul.addr %s254, 16
        %s256 = scalar_lea.vmem [#allocation5], %s255
        %p257 = scmp.lt.s32.totalorder %s24, 1
        %s258 = scalar_select %p257, %s24, 1
        %p259 = scmp.lt.s32.totalorder %s25, 0
        %s260 = scalar_select %p259, %s25, 0
        %s261 = smul.addr %s260, 6
        %s262 = smul.addr %s258, 6
        %s263 = sadd.s32 %s261, %s262
        %s264 = smul.addr %s263, 4
        %s265 = scalar_lea.vmem %s0, %s264
        %v266 = vld [vmem:[%s265] sm:$0xf]
        %s267 = scalar_lea.vmem %s265, 4
        %v268 = vld [vmem:[%s267] sm:$0xf]
        %s269 = scalar_lea.vmem %s265, 8
        %v270 = vld [vmem:[%s269] sm:$0xf]
        %s271 = scalar_lea.vmem %s265, 12
        %v272 = vld [vmem:[%s271] sm:$0xf]
        %s273 = scalar_lea.vmem %s265, 16
        %v274 = vld [vmem:[%s273] sm:$0xf]
        %s275 = scalar_lea.vmem %s265, 20
        %v276 = vld [vmem:[%s275] sm:$0xf]
        %v278 = vrot.slane %v270, 4
        %v281 = vrot.slane %v268, 4
        %v284 = vrot.slane %v276, 4
        %287 = vrot.lane.b32.xlu0 %v266, 120
        %v288 = vpop.permute.xlu0 %287
        %290 = vrot.lane.b32.xlu0 %v278, 120
        %v291 = vpop.permute.xlu0 %290
        %294 = vrot.lane.b32.xlu0 %v274, 120
        %v295 = vpop.permute.xlu0 %294
        %vm296 = vcmask 1043456
        %v297 = vsel %vm296, %v266, %v278
        %v298 = vsel %vm296, %v274, %v281
        %v299 = vsel %vm296, %v272, %v284
        %v300 = vsel %vm296, %v288, %v291
        %v301 = vld [vmem:[#allocation2] sm:$0xff]
        %v302 = vld [vmem:[#allocation2 + $0x8] sm:$0xf]
        %vm303 = vcmask 293888
        %v305 = vsel %vm303, %v301, 0
        %v308 = vsel %vm303, %v302, 0
        %v310 = vsel %vm296, %v295, 0
        %312 = vmatprep.subr.mxu0 0.0
        %313 = vmatpush1.msra.mxu0 0.0
        %314 = vmatprep.subr.mxu0 0.0
        %315 = vmatpush1.msra.mxu0 0.0
        %316 = vmatprep.subr.mxu0 0.0
        %317 = vmatpush1.msra.mxu0 0.0
        %318 = vmatprep.subr.mxu0 0.0
        %319 = vmatpush1.msra.mxu0 0.0
        %320 = vmatprep.subr.mxu0 0.0
        %321 = vmatpush1.msra.mxu0 0.0
        %322 = vmatprep.subr.mxu0 0.0
        %323 = vmatpush1.msra.mxu0 0.0
        %324 = vmatprep.subr.mxu0 0.0
        %325 = vmatpush1.msra.mxu0 0.0
        %326 = vmatprep.subr.mxu0 0.0
        %327 = vmatpush1.msra.mxu0 0.0
        %328 = vmatprep.subr.mxu0 0.0
        %329 = vmatpush1.msra.mxu0 0.0
        %330 = vmatprep.subr.mxu0 0.0
        %331 = vmatpush1.msra.mxu0 0.0
        %332 = vmatprep.subr.mxu0 0.0
        %333 = vmatpush1.msra.mxu0 0.0
        %334 = vmatprep.subr.mxu0 0.0
        %335 = vmatpush1.msra.mxu0 %v310
        %336 = vmatprep.subr.mxu0 0.0
        %337 = vmatpush1.msra.mxu0 %v300
        %338 = vmatprep.subr.mxu0 0.0
        %339 = vmatpush1.msra.mxu0 %v299
        %340 = vmatprep.subr.mxu0 0.0
        %341 = vmatpush1.msra.mxu0 %v298
        %342 = vmatprep.subr.mxu0 0.0
        %343 = vmatpush1.msra.mxu0 %v297
        %344 = vmatprep.subr.mxu0 0.0
        %345 = vmatpush2.msra.mxu0 0.0
        %346 = vmatprep.subr.mxu0 0.0
        %347 = vmatpush2.msra.mxu0 0.0
        %348 = vmatprep.subr.mxu0 0.0
        %349 = vmatpush2.msra.mxu0 0.0
        %350 = vmatprep.subr.mxu0 0.0
        %351 = vmatpush2.msra.mxu0 0.0
        %352 = vmatprep.subr.mxu0 0.0
        %353 = vmatpush2.msra.mxu0 0.0
        %354 = vmatprep.subr.mxu0 0.0
        %355 = vmatpush2.msra.mxu0 0.0
        %356 = vmatprep.subr.mxu0 0.0
        %357 = vmatpush2.msra.mxu0 0.0
        %358 = vmatprep.subr.mxu0 0.0
        %359 = vmatpush2.msra.mxu0 0.0
        %360 = vmatprep.subr.mxu0 0.0
        %361 = vmatpush2.msra.mxu0 0.0
        %362 = vmatprep.subr.mxu0 0.0
        %363 = vmatpush2.msra.mxu0 0.0
        %364 = vmatprep.subr.mxu0 0.0
        %365 = vmatpush2.msra.mxu0 0.0
        %366 = vmatprep.subr.mxu0 0.0
        %367 = vmatpush2.msra.mxu0 0.0
        %368 = vmatprep.subr.mxu0 0.0
        %369 = vmatpush2.msra.mxu0 0.0
        %370 = vmatprep.subr.mxu0 0.0
        %371 = vmatpush2.msra.mxu0 0.0
        %372 = vmatprep.subr.mxu0 0.0
        %373 = vmatpush2.msra.mxu0 0.0
        %374 = vmatprep.subr.mxu0 0.0
        %375 = vmatpush2.msra.mxu0 0.0
        %376 = vmatprep.mubr.f32.mxu0 0.0
        %377 = vmatmul.mubr.f32.gmra.mxu0 %v305
        %v378 = vpop.f32.mrf.mxu0
        %v379 = vadd.f32 0.0, %v378
        %v380 = vpop.f32.mrf.mxu0
        %381 = vmatprep.mubr.f32.mxu0 0.0
        %382 = vmatmul.mubr.f32.gmra.mxu0 %v308
        %v383 = vpop.f32.mrf.mxu0
        %v384 = vadd.f32 0.0, %v383
        %v385 = vpop.f32.mrf.mxu0
        %386 = vdwg.mxu0
        %v387 = vld [vmem:[%s2] sm:$0xff]
        %v388 = vld [vmem:[%s2 + $0x8] sm:$0xf]
        %390 = vset.pattern.permute.xlu0 0
        %391 = vperm.xlu0 %390, %v387
        %v392 = vpop.permute.xlu0 %391
        %395 = vset.pattern.permute.xlu0 0
        %396 = vperm.xlu0 %395, %v388
        %v397 = vpop.permute.xlu0 %396
        %v399 = vmul.f32 %v379, %v392
        %v400 = vmul.f32 %v384, %v397
        %v401 = vld [vmem:[%s3] sm:$0xff]
        %v402 = vld [vmem:[%s3 + $0x8] sm:$0xf]
        %404 = vset.pattern.permute.xlu0 0
        %405 = vperm.xlu0 %404, %v401
        %v406 = vpop.permute.xlu0 %405
        %409 = vset.pattern.permute.xlu0 0
        %410 = vperm.xlu0 %409, %v402
        %v411 = vpop.permute.xlu0 %410
        %v413 = vadd.f32 %v399, %v406
        %v414 = vadd.f32 %v400, %v411
        %vm415 = vcmp.gt.f32.partialorder %v413, 0.0
        %vm416 = vcmp.gt.f32.partialorder %v414, 0.0
        %v417 = vld [vmem:[%s4] sm:$0xff]
        %v418 = vld [vmem:[%s4 + $0x8] sm:$0xf]
        %420 = vset.pattern.permute.xlu0 0
        %421 = vperm.xlu0 %420, %v417
        %v422 = vpop.permute.xlu0 %421
        %425 = vset.pattern.permute.xlu0 0
        %426 = vperm.xlu0 %425, %v418
        %v427 = vpop.permute.xlu0 %426
        %v429 = vmul.f32 %v422, %v413
        %v430 = vmul.f32 %v427, %v414
        %v431 = vsel %vm415, %v413, %v429
        %v432 = vsel %vm416, %v414, %v430
        %v433 = vmax.f32 %v272, %v276
        %v434 = vmax.f32 %v270, %v274
        %436 = vrot.lane.b32.xlu0 %v434, 120
        %v437 = vpop.permute.xlu0 %436
        %v439 = vmax.f32 %v433, %v437
        %v441 = vrot.slane %v439, 4
        %v443 = vsel %vm296, %v432, %v441
        %vm444 = vcmask 523264
        %445 = vst.msk [vmem:[%s256] sm:$0xff] %vm444, %v431
        %446 = vst.msk [vmem:[%s256 + $0x8] sm:$0xff] %vm444, %v443
        %s447 = sand.u32 %s154, 1
        %s448 = scalar_lea.sflag [#allocation4], %s447
        %s449 = sand.u32 %s154, 1
        %s450 = smul.addr %s449, 16
        %s451 = scalar_lea.vmem [#allocation5], %s450
        // Predicated region
        $region45: #{tpu_custom_call.1} parent=39 // pred_check
          %p452 = pneg %p164
        $region46: #{tpu_custom_call.1} parent=39 // pred_check_branch
          %454 = sbr.rel (%p452) target = $region48
        $region47: #{tpu_custom_call.1} parent=39 // pred_region
          %s456 = ssub.s32 256, 256
          %457 = vsyncadd %s448, %s456
          %s458 = smul.addr %s24, 2
          %s459 = sadd.s32 %s25, %s458
          %s460 = smul.addr %s459, 128
          %s461 = scalar_lea.hbm %s5, %s460
          %s462 = sshll.u32 %s451, 4
          %s463 = int_to_ptr.vmem [resolvable:$true] %s462
          %468 = dma.vmem_to_hbm [thread:$0]  %s463, 256, %s461, %s448, 128, 128, 8
        $region48: #{tpu_custom_call.1} parent=39 // pred_fallthru
          _
      $region40: #{tpu_custom_call.1} parent=5 // pred_fallthru
        _
      %p469 = scmp.le.s32.totalorder 2, %s15
      // Predicated region
      $region49: #{tpu_custom_call.1} parent=5 // pred_check
        %p470 = pneg %p469
      $region50: #{tpu_custom_call.1} parent=5 // pred_check_branch
        %472 = sbr.rel (%p470) target = $region52
      $region51: #{tpu_custom_call.1} parent=5 // pred_region
        %s473 = ssub.s32 %s15, 2
        // Predicated region
        $region53: #{tpu_custom_call.1} parent=51 // pred_check
          %p474 = pneg %p170
        $region54: #{tpu_custom_call.1} parent=51 // pred_check_branch
          %476 = sbr.rel (%p474) target = $region56
        $region55: #{tpu_custom_call.1} parent=51 // pred_region
          %s477 = sand.u32 %s155, 1
          %s478 = scalar_lea.sflag [#allocation4], %s477
          %s479 = sand.u32 %s155, 1
          %s480 = smul.addr %s479, 16
          %s481 = scalar_lea.vmem [#allocation5], %s480
          %482 = dma.done %s478, 256
        $region56: #{tpu_custom_call.1} parent=51 // pred_fallthru
          _
      $region52: #{tpu_custom_call.1} parent=5 // pred_fallthru
        _
    $region6: #{tpu_custom_call.1} parent=1 // loop_footer
      %s19 = sadd.s32 1, %s15
    $region7: #{tpu_custom_call.1} parent=1 // loop_footer_branch
      %14 = sbr.rel target = $region3
    $region8: #{tpu_custom_call.1} parent=1 // loop_exit
      _
    %483 = vsyncpa [#allocation3], 1
    %s484 = scalar_lea.sflag [#allocation3], 1
    %485 = vsyncpa %s484, 1
    %486 = vsyncpa [#allocation4], 1
    %s487 = scalar_lea.sflag [#allocation4], 1
    %488 = vsyncpa %s487, 1

</llo_original>
